<compile_context>
chip_gen: v7x
topology: tpu7x:2x2x1
jax: 0.10.0
libtpu: 0.0.40
codegen_flags: <defaults>
</compile_context>

<pallas_src>
import functools

import jax
import jax.numpy as jnp
from jax import lax
from jax.experimental import pallas as pl
from jax.experimental.pallas import tpu as pltpu


def _round_up(x: int, m: int) -> int:
    return ((x + m - 1) // m) * m


def _matmul_bias_kernel(x_ref, w_ref, b_ref, o_ref, acc_ref):
    # x_ref:   (tm, tk) input tile
    # w_ref:   (tn, tk) weight tile in its native [N, Kp] layout
    # b_ref:   (1, tn)  bias tile
    # o_ref:   (tm, tn) output tile
    # acc_ref: (tm, tn) f32 accumulator (persists across the K grid axis)
    k = pl.program_id(2)

    @pl.when(k == 0)
    def _():
        # Fuse the bias: initialize the accumulator with the broadcast bias
        # instead of an extra full-tile add in the epilogue.
        acc_ref[...] = jnp.broadcast_to(
            b_ref[...].astype(jnp.float32), acc_ref.shape)

    acc_ref[...] += lax.dot_general(
        x_ref[...], w_ref[...],
        dimension_numbers=(((1,), (1,)), ((), ())),   # X @ W^T on the MXU
        preferred_element_type=jnp.float32)

    @pl.when(k == pl.num_programs(2) - 1)
    def _():
        o_ref[...] = acc_ref[...].astype(o_ref.dtype)


def _matmul_nobias_kernel(x_ref, w_ref, o_ref, acc_ref):
    k = pl.program_id(2)

    @pl.when(k == 0)
    def _():
        acc_ref[...] = jnp.zeros_like(acc_ref)

    acc_ref[...] += lax.dot_general(
        x_ref[...], w_ref[...],
        dimension_numbers=(((1,), (1,)), ((), ())),
        preferred_element_type=jnp.float32)

    @pl.when(k == pl.num_programs(2) - 1)
    def _():
        o_ref[...] = acc_ref[...].astype(o_ref.dtype)


@functools.partial(jax.jit, static_argnames=("skip_bias_add", "tm", "tn", "tk"))
def mc2_row_parallel_linear_forward(input_, weight, bias=None, *,
                                    skip_bias_add=False,
                                    tm=256, tn=512, tk=512):
    """Forward pass of MC2RowParallelLinearImpl (tp world_size == 1).

    input_: [S, B, Kp]   (Kp = input_size_per_partition)
    weight: [N, Kp]      (output_size x input_size_per_partition)
    bias:   [N] or None
    returns (output [S, B, N], output_bias)
    """
    S, B, Kp = input_.shape
    N, Kp_w = weight.shape
    assert Kp == Kp_w, "input / weight contraction-dim mismatch"

    M = S * B
    x2d = input_.reshape(M, Kp)

    add_bias_in_kernel = (not skip_bias_add) and (bias is not None)

    # Clamp tiles to the (padded) problem size while staying (8, 128)-aligned.
    tm = min(tm, _round_up(M, 8))
    tn = min(tn, _round_up(N, 128))
    tk = min(tk, _round_up(Kp, 128))

    M_pad = _round_up(M, tm)
    N_pad = _round_up(N, tn)
    K_pad = _round_up(Kp, tk)

    # Zero-pad so every tile is full: K-padding contributes 0 to the dot,
    # M/N padding is sliced off below.  (No-op when already aligned.)
    if (M_pad, K_pad) != (M, Kp):
        x2d = jnp.pad(x2d, ((0, M_pad - M), (0, K_pad - Kp)))
    w = weight
    if (N_pad, K_pad) != (N, Kp):
        w = jnp.pad(w, ((0, N_pad - N), (0, K_pad - Kp)))

    grid = (M_pad // tm, N_pad // tn, K_pad // tk)

    itemsize = jnp.dtype(input_.dtype).itemsize
    cost = pl.CostEstimate(
        flops=2 * M * Kp * N,
        transcendentals=0,
        bytes_accessed=(M_pad * K_pad * itemsize
                        + N_pad * K_pad * jnp.dtype(weight.dtype).itemsize
                        + M_pad * N_pad * itemsize))

    x_spec = pl.BlockSpec((tm, tk), lambda i, j, k: (i, k))
    w_spec = pl.BlockSpec((tn, tk), lambda i, j, k: (j, k))
    o_spec = pl.BlockSpec((tm, tn), lambda i, j, k: (i, j))
    scratch = [pltpu.VMEM((tm, tn), jnp.float32)]

    compiler_params = pltpu.CompilerParams(
        dimension_semantics=("parallel", "parallel", "arbitrary"))
    out_shape = jax.ShapeDtypeStruct((M_pad, N_pad), input_.dtype)

    if add_bias_in_kernel:
        b_row = bias.reshape(1, N).astype(input_.dtype)
        if N_pad != N:
            b_row = jnp.pad(b_row, ((0, 0), (0, N_pad - N)))
        b_spec = pl.BlockSpec((1, tn), lambda i, j, k: (0, j))
        out2d = pl.pallas_call(
            _matmul_bias_kernel,
            out_shape=out_shape,
            grid_spec=pltpu.PrefetchScalarGridSpec(
                num_scalar_prefetch=0, grid=grid,
                in_specs=[x_spec, w_spec, b_spec],
                out_specs=o_spec,
                scratch_shapes=scratch),
            compiler_params=compiler_params,
            cost_estimate=cost,
        )(x2d, w, b_row)
    else:
        out2d = pl.pallas_call(
            _matmul_nobias_kernel,
            out_shape=out_shape,
            grid_spec=pltpu.PrefetchScalarGridSpec(
                num_scalar_prefetch=0, grid=grid,
                in_specs=[x_spec, w_spec],
                out_specs=o_spec,
                scratch_shapes=scratch),
            compiler_params=compiler_params,
            cost_estimate=cost,
        )(x2d, w)

    output = out2d[:M, :N].reshape(S, B, N)
    output_bias = bias if skip_bias_add else None
    return output, output_bias


class MC2RowParallelLinearPallas:
    """Minimal JAX/Pallas counterpart of MC2RowParallelLinearImpl
    (tensor-parallel world_size == 1, so input_size_per_partition == input_size)."""

    def __init__(self, input_size, output_size, *, bias=True,
                 skip_bias_add=False, params_dtype=jnp.float32, key=None):
        self.input_size = input_size
        self.output_size = output_size
        self.skip_bias_add = skip_bias_add
        self.input_size_per_partition = input_size  # world_size == 1

        key = key if key is not None else jax.random.PRNGKey(0)
        # deterministic init_method: small normal, like megatron's init_method_normal
        self.weight = (0.02 * jax.random.normal(
            key, (output_size, self.input_size_per_partition))).astype(params_dtype)
        # bias is zero-initialized in the reference module
        self.bias = jnp.zeros((output_size,), dtype=params_dtype) if bias else None

    def __call__(self, input_):
        return mc2_row_parallel_linear_forward(
            input_, self.weight, self.bias, skip_bias_add=self.skip_bias_add)


if __name__ == "__main__":
    key = jax.random.PRNGKey(0)
    k_x, k_w, k_b, k_x2, k_w2 = jax.random.split(key, 5)

    # --- Case 1: fused in-kernel bias (skip_bias_add=False), aligned dims ---
    seq, batch, hidden, output = 8, 2, 32, 32
    layer = MC2RowParallelLinearPallas(
        input_size=hidden, output_size=output,
        bias=True, skip_bias_add=False, key=k_w)
    # use a non-zero bias so the fused-bias path is actually exercised
    layer.bias = (0.1 * jax.random.normal(k_b, (output,))).astype(jnp.float32)

    x = jax.random.normal(k_x, (seq, batch, hidden), dtype=jnp.float32)
    out, out_bias = layer(x)
    out = jax.block_until_ready(out)

    ref = jnp.einsum("sbk,nk->sbn", x, layer.weight) + layer.bias
    assert out.shape == (seq, batch, output)
    assert out_bias is None
    assert jnp.allclose(out, ref, atol=1e-4, rtol=1e-4)

    # --- Case 2: skip_bias_add=True, non-128-multiple dims (padding path) ---
    seq2, batch2, hidden2, output2 = 7, 3, 160, 96
    layer2 = MC2RowParallelLinearPallas(
        input_size=hidden2, output_size=output2,
        bias=True, skip_bias_add=True, key=k_w2)
    x2 = jax.random.normal(k_x2, (seq2, batch2, hidden2), dtype=jnp.float32)
    out2, out_bias2 = layer2(x2)
    out2 = jax.block_until_ready(out2)

    ref2 = jnp.einsum("sbk,nk->sbn", x2, layer2.weight)
    assert out2.shape == (seq2, batch2, output2)
    assert out_bias2 is not None
    assert jnp.allclose(out2, ref2, atol=1e-4, rtol=1e-4)

    print("KERNEL_OK")
</pallas_src>

<mosaic_0001>
module attributes {stable_mosaic.version = 11 : i64} {
  func.func @_matmul_bias_kernel(%arg0: i32, %arg1: i32, %arg2: i32, %arg3: memref<16x128xf32, #tpu.memory_space<vmem>>, %arg4: memref<128x128xf32, #tpu.memory_space<vmem>>, %arg5: memref<1x128xf32, #tpu.memory_space<vmem>>, %arg6: memref<16x128xf32, #tpu.memory_space<vmem>>, %arg7: memref<16x128xf32, #tpu.memory_space<vmem>>) attributes {dimension_semantics = [#tpu.dimension_semantics<parallel>, #tpu.dimension_semantics<parallel>, #tpu.dimension_semantics<arbitrary>], iteration_bounds = array<i64: 1, 1, 1>, scalar_prefetch = 0 : i64, scratch_operands = 1 : i64, tpu.core_type = #tpu.core_type<tc>, window_params = [{transform_indices = @transform_0, window_bounds = array<i64: 16, 128>}, {transform_indices = @transform_1, window_bounds = array<i64: 128, 128>}, {transform_indices = @transform_2, window_bounds = array<i64: 1, 128>}, {transform_indices = @transform_3, window_bounds = array<i64: 16, 128>}]} {
    %c0_i32 = arith.constant 0 : i32
    %0 = arith.cmpi eq, %arg2, %c0_i32 : i32
    %1 = arith.extui %0 : i1 to i32
    %c0_i32_0 = arith.constant 0 : i32
    %2 = arith.cmpi ne, %1, %c0_i32_0 : i32
    scf.if %2 {
      %c0_10 = arith.constant 0 : index
      %c0_11 = arith.constant 0 : index
      %12 = vector.load %arg5[%c0_10, %c0_11] : memref<1x128xf32, #tpu.memory_space<vmem>>, vector<1x128xf32>
      %13 = vector.shape_cast %12 : vector<1x128xf32> to vector<1x128xf32>
      %14 = vector.broadcast %13 : vector<1x128xf32> to vector<16x128xf32>
      %c0_12 = arith.constant 0 : index
      %c0_13 = arith.constant 0 : index
      %15 = vector.load %arg7[%c0_12, %c0_13] : memref<16x128xf32, #tpu.memory_space<vmem>>, vector<16x128xf32>
      tpu.vector_store %arg7[%c0_12, %c0_13], %14 {strides = array<i32>} : memref<16x128xf32, #tpu.memory_space<vmem>>, vector<16x128xf32>,
    } else {
    }
    %c0 = arith.constant 0 : index
    %c0_1 = arith.constant 0 : index
    %3 = vector.load %arg7[%c0, %c0_1] : memref<16x128xf32, #tpu.memory_space<vmem>>, vector<16x128xf32>
    %c0_2 = arith.constant 0 : index
    %c0_3 = arith.constant 0 : index
    %4 = vector.load %arg3[%c0_2, %c0_3] : memref<16x128xf32, #tpu.memory_space<vmem>>, vector<16x128xf32>
    %c0_4 = arith.constant 0 : index
    %c0_5 = arith.constant 0 : index
    %5 = vector.load %arg4[%c0_4, %c0_5] : memref<128x128xf32, #tpu.memory_space<vmem>>, vector<128x128xf32>
    %cst = arith.constant dense<0.000000e+00> : vector<16x128xf32>
    %6 = tpu.matmul %4, %5, %cst {dimension_numbers = #tpu.dot_dimension_numbers<[1], [1], [0], [0], [0, 0, 1, 0], [], []>} : vector<16x128xf32>, vector<128x128xf32>, vector<16x128xf32> -> vector<16x128xf32>
    %7 = arith.addf %3, %6 : vector<16x128xf32>
    %c0_6 = arith.constant 0 : index
    %c0_7 = arith.constant 0 : index
    %8 = vector.load %arg7[%c0_6, %c0_7] : memref<16x128xf32, #tpu.memory_space<vmem>>, vector<16x128xf32>
    tpu.vector_store %arg7[%c0_6, %c0_7], %7 {strides = array<i32>} : memref<16x128xf32, #tpu.memory_space<vmem>>, vector<16x128xf32>,
    %c0_i32_8 = arith.constant 0 : i32
    %9 = arith.cmpi eq, %arg2, %c0_i32_8 : i32
    %10 = arith.extui %9 : i1 to i32
    %c0_i32_9 = arith.constant 0 : i32
    %11 = arith.cmpi ne, %10, %c0_i32_9 : i32
    scf.if %11 {
      %c0_10 = arith.constant 0 : index
      %c0_11 = arith.constant 0 : index
      %12 = vector.load %arg7[%c0_10, %c0_11] : memref<16x128xf32, #tpu.memory_space<vmem>>, vector<16x128xf32>
      %c0_12 = arith.constant 0 : index
      %c0_13 = arith.constant 0 : index
      %13 = vector.load %arg6[%c0_12, %c0_13] : memref<16x128xf32, #tpu.memory_space<vmem>>, vector<16x128xf32>
      tpu.vector_store %arg6[%c0_12, %c0_13], %12 {strides = array<i32>} : memref<16x128xf32, #tpu.memory_space<vmem>>, vector<16x128xf32>,
    } else {
    }
    return
  }
  func.func @transform_0(%arg0: i32, %arg1: i32, %arg2: i32) -> (i32, i32) {
    %c0_i32 = arith.constant 0 : i32
    return %arg0, %arg2 : i32, i32
  }
  func.func @transform_1(%arg0: i32, %arg1: i32, %arg2: i32) -> (i32, i32) {
    %c0_i32 = arith.constant 0 : i32
    return %arg1, %arg2 : i32, i32
  }
  func.func @transform_2(%arg0: i32, %arg1: i32, %arg2: i32) -> (i32, i32) {
    %c0_i32 = arith.constant 0 : i32
    %c0_i32_0 = arith.constant 0 : i32
    return %c0_i32, %arg1 : i32, i32
  }
  func.func @transform_3(%arg0: i32, %arg1: i32, %arg2: i32) -> (i32, i32) {
    %c0_i32 = arith.constant 0 : i32
    return %arg0, %arg1 : i32, i32
  }
}

</mosaic_0001>

<llo_original>
// kernel: mc2_row_parallel_linear_forward.1
$region0: #{mc2_row_parallel_linear_forward.1}
  #allocation0 [shape = 'u32[]', space=smem, size = 0x4, offset = 0x4, fixed_abs, tag = 'smem constant byte address 0x4 - core index']
  #allocation1 [shape = 'u32[144,128]{1,0:T(1,128)}', space=vmem, size = 0x12000, scoped, tag = 'internal scratch']
  #allocation2 [shape = 'f32[16,128]{1,0:T(8,128)}', space=vmem, size = 0x2000, scoped, tag = 'scratch operand']
  %s0 = inlined_call_operand.vmem [shape: f32[16,128], index: 0, kind: input, shape index: {}]
  %s1 = inlined_call_operand.vmem [shape: f32[128,128], index: 1, kind: input, shape index: {}]
  %s2 = inlined_call_operand.vmem [shape: f32[1,128], index: 2, kind: input, shape index: {}]
  %s3 = inlined_call_operand.hbm [shape: f32[16,128], index: 3, kind: output, shape index: {}]
  %s4 = sld [smem:[#allocation0]]
  $region30: #{mc2_row_parallel_linear_forward.1} parent=0
    _
  %s6 = ssub.s32 1, %s4
  %s7 = scalar_select 0, %s6, %s4
  $region1: #{mc2_row_parallel_linear_forward.1} parent=0
    #allocation3 [shape = 'u8[8192]{0}', space=vmem, size = 0x2000, scoped, tag = 'output window, operand 0, single buffered']
    #allocation4 [shape = 's32[1]{0}', space=sflag, size = 0x4, scoped, tag = 'scoped memory for mc2_row_parallel_linear_forward.1']
    %8 = vsyncpa [#allocation4], 0
    // Predicated region
    $region2: #{mc2_row_parallel_linear_forward.1} parent=1 // pred_check
      _
    $region3: #{mc2_row_parallel_linear_forward.1} parent=1 // pred_check_branch
      %10 = sbr.rel (0) target = $region5
    $region4: #{mc2_row_parallel_linear_forward.1} parent=1 // pred_region
      _
    $region5: #{mc2_row_parallel_linear_forward.1} parent=1 // pred_fallthru
      _
    // Predicated region
    $region6: #{mc2_row_parallel_linear_forward.1} parent=1 // pred_check
      _
    $region7: #{mc2_row_parallel_linear_forward.1} parent=1 // pred_check_branch
      %12 = sbr.rel (0) target = $region9
    $region8: #{mc2_row_parallel_linear_forward.1} parent=1 // pred_region
      _
    $region9: #{mc2_row_parallel_linear_forward.1} parent=1 // pred_fallthru
      _
    // Predicated region
    $region10: #{mc2_row_parallel_linear_forward.1} parent=1 // pred_check
      _
    $region11: #{mc2_row_parallel_linear_forward.1} parent=1 // pred_check_branch
      %14 = sbr.rel (0) target = $region13
    $region12: #{mc2_row_parallel_linear_forward.1} parent=1 // pred_region
      _
    $region13: #{mc2_row_parallel_linear_forward.1} parent=1 // pred_fallthru
      _
    %p15 = scmp.eq.s32.totalorder 0, 0
    // Predicated region
    $region14: #{mc2_row_parallel_linear_forward.1} parent=1 // pred_check
      %p16 = pneg %p15
    $region15: #{mc2_row_parallel_linear_forward.1} parent=1 // pred_check_branch
      %18 = sbr.rel (%p16) target = $region17
    $region16: #{mc2_row_parallel_linear_forward.1} parent=1 // pred_region
      %v19 = vld [vmem:[%s2] sm:$0x1]
      %v21 = vlaneseq
      %v22 = vshrl.u32 %v21, 7
      %v23 = vsub.s32 0, %v22
      %v24 = vrot.slane %v19, %v23
      %26 = vst [vmem:[#allocation2] sm:$0xff] %v24
      %27 = vst [vmem:[#allocation2 + $0x8] sm:$0xff] %v24
    $region17: #{mc2_row_parallel_linear_forward.1} parent=1 // pred_fallthru
      _
    %v28 = vld [vmem:[#allocation2] sm:$0xff]
    %v29 = vld [vmem:[#allocation2 + $0x8] sm:$0xff]
    %v30 = vld [vmem:[%s0] sm:$0xff]
    %v31 = vld [vmem:[%s0 + $0x8] sm:$0xff]
    %v32 = vld [vmem:[%s1] sm:$0xff]
    %v33 = vld [vmem:[%s1 + $0x8] sm:$0xff]
    %v34 = vld [vmem:[%s1 + $0x10] sm:$0xff]
    %v35 = vld [vmem:[%s1 + $0x18] sm:$0xff]
    %v36 = vld [vmem:[%s1 + $0x20] sm:$0xff]
    %v37 = vld [vmem:[%s1 + $0x28] sm:$0xff]
    %v38 = vld [vmem:[%s1 + $0x30] sm:$0xff]
    %v39 = vld [vmem:[%s1 + $0x38] sm:$0xff]
    %v40 = vld [vmem:[%s1 + $0x40] sm:$0xff]
    %v41 = vld [vmem:[%s1 + $0x48] sm:$0xff]
    %v42 = vld [vmem:[%s1 + $0x50] sm:$0xff]
    %v43 = vld [vmem:[%s1 + $0x58] sm:$0xff]
    %v44 = vld [vmem:[%s1 + $0x60] sm:$0xff]
    %v45 = vld [vmem:[%s1 + $0x68] sm:$0xff]
    %v46 = vld [vmem:[%s1 + $0x70] sm:$0xff]
    %v47 = vld [vmem:[%s1 + $0x78] sm:$0xff]
    %48 = vmatprep.subr.mxu0 0.0
    %49 = vmatpush1.xpose.msra.mxu0 %v32
    %50 = vmatprep.subr.mxu0 0.0
    %51 = vmatpush1.xpose.msra.mxu0 %v33
    %52 = vmatprep.subr.mxu0 0.0
    %53 = vmatpush1.xpose.msra.mxu0 %v34
    %54 = vmatprep.subr.mxu0 0.0
    %55 = vmatpush1.xpose.msra.mxu0 %v35
    %56 = vmatprep.subr.mxu0 0.0
    %57 = vmatpush1.xpose.msra.mxu0 %v36
    %58 = vmatprep.subr.mxu0 0.0
    %59 = vmatpush1.xpose.msra.mxu0 %v37
    %60 = vmatprep.subr.mxu0 0.0
    %61 = vmatpush1.xpose.msra.mxu0 %v38
    %62 = vmatprep.subr.mxu0 0.0
    %63 = vmatpush1.xpose.msra.mxu0 %v39
    %64 = vmatprep.subr.mxu0 0.0
    %65 = vmatpush1.xpose.msra.mxu0 %v40
    %66 = vmatprep.subr.mxu0 0.0
    %67 = vmatpush1.xpose.msra.mxu0 %v41
    %68 = vmatprep.subr.mxu0 0.0
    %69 = vmatpush1.xpose.msra.mxu0 %v42
    %70 = vmatprep.subr.mxu0 0.0
    %71 = vmatpush1.xpose.msra.mxu0 %v43
    %72 = vmatprep.subr.mxu0 0.0
    %73 = vmatpush1.xpose.msra.mxu0 %v44
    %74 = vmatprep.subr.mxu0 0.0
    %75 = vmatpush1.xpose.msra.mxu0 %v45
    %76 = vmatprep.subr.mxu0 0.0
    %77 = vmatpush1.xpose.msra.mxu0 %v46
    %78 = vmatprep.subr.mxu0 0.0
    %79 = vmatpush1.xpose.msra.mxu0 %v47
    %80 = vmatprep.subr.mxu0 0.0
    %81 = vmatpush1.xpose.msra.mxu0 0.0
    %82 = vmatprep.subr.mxu0 0.0
    %83 = vmatpush1.xpose.msra.mxu0 0.0
    %84 = vmatprep.subr.mxu0 0.0
    %85 = vmatpush1.xpose.msra.mxu0 0.0
    %86 = vmatprep.subr.mxu0 0.0
    %87 = vmatpush1.xpose.msra.mxu0 0.0
    %88 = vmatprep.subr.mxu0 0.0
    %89 = vmatpush1.xpose.msra.mxu0 0.0
    %90 = vmatprep.subr.mxu0 0.0
    %91 = vmatpush1.xpose.msra.mxu0 0.0
    %92 = vmatprep.subr.mxu0 0.0
    %93 = vmatpush1.xpose.msra.mxu0 0.0
    %94 = vmatprep.subr.mxu0 0.0
    %95 = vmatpush1.xpose.msra.mxu0 0.0
    %96 = vmatprep.subr.mxu0 0.0
    %97 = vmatpush1.xpose.msra.mxu0 0.0
    %98 = vmatprep.subr.mxu0 0.0
    %99 = vmatpush1.xpose.msra.mxu0 0.0
    %100 = vmatprep.subr.mxu0 0.0
    %101 = vmatpush1.xpose.msra.mxu0 0.0
    %102 = vmatprep.subr.mxu0 0.0
    %103 = vmatpush1.xpose.msra.mxu0 0.0
    %104 = vmatprep.subr.mxu0 0.0
    %105 = vmatpush1.xpose.msra.mxu0 0.0
    %106 = vmatprep.subr.mxu0 0.0
    %107 = vmatpush1.xpose.msra.mxu0 0.0
    %108 = vmatprep.subr.mxu0 0.0
    %109 = vmatpush1.xpose.msra.mxu0 0.0
    %110 = vmatprep.subr.mxu0 0.0
    %111 = vmatpush1.xpose.msra.mxu0 0.0
    %112 = vmatprep.mubr.f32.mxu0 0.0
    %113 = vmatmul.mubr.f32.gmra.mrb[0].mxu0 %v30
    %v114 = vpop.f32.mrb[0].mxu0
    %v115 = vadd.f32 0.0, %v114
    %v116 = vpop.f32.mrb[0].mxu0
    %117 = vmatprep.mubr.f32.mxu0 0.0
    %118 = vmatmul.mubr.f32.gmra.mrb[0].mxu0 %v31
    %v119 = vpop.f32.mrb[0].mxu0
    %v120 = vadd.f32 0.0, %v119
    %v121 = vpop.f32.mrb[0].mxu0
    %122 = vdwg.mxu0
    %v123 = vadd.f32 %v28, %v115
    %v124 = vadd.f32 %v29, %v120
    %125 = vst [vmem:[#allocation2] sm:$0xff] %v123
    %126 = vst [vmem:[#allocation2 + $0x8] sm:$0xff] %v124
    // Predicated region
    $region18: #{mc2_row_parallel_linear_forward.1} parent=1 // pred_check
      %p127 = pneg %p15
    $region19: #{mc2_row_parallel_linear_forward.1} parent=1 // pred_check_branch
      %129 = sbr.rel (%p127) target = $region21
    $region20: #{mc2_row_parallel_linear_forward.1} parent=1 // pred_region
      %v130 = vld [vmem:[#allocation2] sm:$0xff]
      %v131 = vld [vmem:[#allocation2 + $0x8] sm:$0xff]
      %132 = vst [vmem:[#allocation3] sm:$0xff] %v130
      %133 = vst [vmem:[#allocation3 + $0x8] sm:$0xff] %v131
    $region21: #{mc2_row_parallel_linear_forward.1} parent=1 // pred_fallthru
      _
    // Predicated region
    $region22: #{mc2_row_parallel_linear_forward.1} parent=1 // pred_check
      _
    $region23: #{mc2_row_parallel_linear_forward.1} parent=1 // pred_check_branch
      %135 = sbr.rel (0) target = $region25
    $region24: #{mc2_row_parallel_linear_forward.1} parent=1 // pred_region
      %s137 = ssub.s32 256, 256
      %138 = vsyncadd [#allocation4], %s137
      %s139 = sshll.u32 [#allocation3], 4
      %s140 = int_to_ptr.vmem [resolvable:$true] %s139
      %145 = dma.vmem_to_hbm [thread:$0]  %s140, 256, %s3, [#allocation4], 128, 128, 8
    $region25: #{mc2_row_parallel_linear_forward.1} parent=1 // pred_fallthru
      _
    // Predicated region
    $region26: #{mc2_row_parallel_linear_forward.1} parent=1 // pred_check
      _
    $region27: #{mc2_row_parallel_linear_forward.1} parent=1 // pred_check_branch
      %147 = sbr.rel (0) target = $region29
    $region28: #{mc2_row_parallel_linear_forward.1} parent=1 // pred_region
      %148 = dma.done [#allocation4], 256
    $region29: #{mc2_row_parallel_linear_forward.1} parent=1 // pred_fallthru
      _
    %149 = vsyncpa [#allocation4], 1

</llo_original>
